<compile_context>
chip_gen: v7x
topology: tpu7x:2x2x1
jax: 0.10.0
libtpu: 0.0.40
codegen_flags: <defaults>
</compile_context>

<pallas_src>
import functools

import jax
import jax.numpy as jnp
from jax import lax
from jax.experimental import pallas as pl
from jax.experimental.pallas import tpu as pltpu


def _halve_to_cap(extent, cap, align):
    """Largest divisor of `extent` obtained by repeated halving that is <= cap
    while keeping alignment (or full extent if alignment can't be kept)."""
    t = extent
    while t > cap and t % 2 == 0 and (t // 2) % align == 0:
        t //= 2
    return t


def _pos_emb_kernel(seed_ref, x_ref, pos_ref, o_ref, *, p, training, n_total, tb, tn):
    # x_ref/o_ref block: (TB, TN); pos_ref block: (1, TN) (broadcast over rows).
    val = x_ref[...] + pos_ref[...]

    if training and p > 0.0:
        ni = pl.program_id(0)
        bi = pl.program_id(1)
        rows = lax.broadcasted_iota(jnp.int32, (tb, tn), 0)
        cols = lax.broadcasted_iota(jnp.int32, (tb, tn), 1)
        # Global flat element index -> unique counter per element (all tiles).
        ctr = ((bi * tb + rows) * n_total + (ni * tn + cols)).astype(jnp.uint32)
        h = ctr ^ seed_ref[0].astype(jnp.uint32)
        # murmur3 fmix32-style mixing (pure uint32 VPU ops, portable everywhere).
        h = h * jnp.uint32(0xCC9E2D51)
        h = (h << 15) | (h >> 17)
        h = h * jnp.uint32(0x1B873593)
        h = h ^ (h >> 16)
        h = h * jnp.uint32(0x85EBCA6B)
        h = h ^ (h >> 13)
        h = h * jnp.uint32(0xC2B2AE35)
        h = h ^ (h >> 16)
        # Integer-threshold keep test: keep with probability (1 - p).
        threshold = jnp.uint32(int(round(p * (1 << 24))))
        keep = (h >> 8) >= threshold
        scale = jnp.asarray(1.0 / (1.0 - p), dtype=val.dtype)
        val = jnp.where(keep, val * scale, jnp.zeros((), dtype=val.dtype))

    o_ref[...] = val.astype(o_ref.dtype)


def position_embeddings(x, pos_emb, *, pdrop=0.0, training=False, seed=0):
    """x: (B, S, E); pos_emb: (1, max_S, E).  Returns dropout(x + pos_emb[:, :S])."""
    b, s, e = x.shape
    n = s * e

    # Lane-dense flattening of (S, E) -> N; pos sliced to current seq length.
    xf = x.reshape(b, n)
    posf = pos_emb[:, :s, :].reshape(1, n).astype(x.dtype)
    seed_arr = jnp.array([seed], dtype=jnp.int32)

    # Tile sizes: keep each block modest (fits v7x's smaller VMEM comfortably
    # while still >= hundreds of KiB for large shapes -> near HBM roofline).
    cap_elems = 128 * 1024  # elements per block (512 KiB at f32)
    tn = _halve_to_cap(n, cap_elems, 128)
    tb = _halve_to_cap(b, max(1, cap_elems // tn), 8)
    grid = (n // tn, b // tb)

    kernel = functools.partial(
        _pos_emb_kernel, p=float(pdrop), training=bool(training),
        n_total=n, tb=tb, tn=tn)

    dtype_bytes = jnp.dtype(x.dtype).itemsize
    cost = pl.CostEstimate(
        flops=b * n,
        transcendentals=0,
        bytes_accessed=(2 * b * n + n) * dtype_bytes)

    out = pl.pallas_call(
        kernel,
        out_shape=jax.ShapeDtypeStruct((b, n), x.dtype),
        grid_spec=pltpu.PrefetchScalarGridSpec(
            num_scalar_prefetch=1,                 # seed lands in SMEM
            grid=grid,                             # (feature tiles, batch tiles)
            in_specs=[
                pl.BlockSpec((tb, tn), lambda ni, bi, seed: (bi, ni)),  # x
                pl.BlockSpec((1, tn), lambda ni, bi, seed: (0, ni)),    # pos (batch-invariant)
            ],
            out_specs=pl.BlockSpec((tb, tn), lambda ni, bi, seed: (bi, ni)),
        ),
        compiler_params=pltpu.CompilerParams(
            dimension_semantics=("parallel", "parallel"),
        ),
        cost_estimate=cost,
    )(seed_arr, xf, posf)

    return out.reshape(b, s, e)


if __name__ == "__main__":
    # Config: max_short_seq_len=16, n_embd=32, embd_pdrop=0.1
    B, SEQ, MAX_SEQ, N_EMBD, PDROP = 2, 8, 16, 32, 0.1

    key = jax.random.PRNGKey(0)
    kx, kp = jax.random.split(key)
    x = jax.random.normal(kx, (B, SEQ, N_EMBD), dtype=jnp.float32)
    # nn.Parameter(torch.zeros(...)) would make the add trivial; use a small
    # deterministic non-zero init for demonstration (shape matches the module).
    pos_emb = 0.02 * jax.random.normal(kp, (1, MAX_SEQ, N_EMBD), dtype=jnp.float32)

    # Eval path (dropout = identity): verify exactly against reference math.
    out_eval = position_embeddings(x, pos_emb, pdrop=PDROP, training=False)
    jax.block_until_ready(out_eval)
    ref = x + pos_emb[:, :SEQ, :]
    assert jnp.allclose(out_eval, ref, atol=1e-6), "eval-mode mismatch"

    # Training path (dropout active): exercise the in-kernel mask/scale.
    out_train = position_embeddings(x, pos_emb, pdrop=PDROP, training=True, seed=1234)
    jax.block_until_ready(out_train)
    assert out_train.shape == (B, SEQ, N_EMBD)
    scaled = ref * (1.0 / (1.0 - PDROP))
    ok = jnp.logical_or(jnp.isclose(out_train, 0.0, atol=1e-7),
                        jnp.isclose(out_train, scaled, rtol=1e-5, atol=1e-6))
    assert bool(jnp.all(ok)), "train-mode dropout values inconsistent"
    drop_frac = float(jnp.mean((out_train == 0.0).astype(jnp.float32)))
    assert 0.0 < drop_frac < 0.5, f"unreasonable drop fraction {drop_frac}"

    print("KERNEL_OK")
</pallas_src>

<mosaic_0001>
module attributes {stable_mosaic.version = 11 : i64} {
  func.func @_pos_emb_kernel(%arg0: i32, %arg1: i32, %arg2: memref<1xi32, #tpu.memory_space<smem>>, %arg3: memref<2x256xf32, #tpu.memory_space<vmem>>, %arg4: memref<1x256xf32, #tpu.memory_space<vmem>>, %arg5: memref<2x256xf32, #tpu.memory_space<vmem>>) attributes {dimension_semantics = [#tpu.dimension_semantics<parallel>, #tpu.dimension_semantics<parallel>], iteration_bounds = array<i64: 1, 1>, scalar_prefetch = 1 : i64, scratch_operands = 0 : i64, tpu.core_type = #tpu.core_type<tc>, window_params = [{transform_indices = @transform_0, window_bounds = array<i64: 2, 256>}, {transform_indices = @transform_1, window_bounds = array<i64: 1, 256>}, {transform_indices = @transform_2, window_bounds = array<i64: 2, 256>}]} {
    %c0 = arith.constant 0 : index
    %c0_0 = arith.constant 0 : index
    %0 = vector.load %arg3[%c0, %c0_0] : memref<2x256xf32, #tpu.memory_space<vmem>>, vector<2x256xf32>
    %c0_1 = arith.constant 0 : index
    %c0_2 = arith.constant 0 : index
    %1 = vector.load %arg4[%c0_1, %c0_2] : memref<1x256xf32, #tpu.memory_space<vmem>>, vector<1x256xf32>
    %2 = vector.broadcast %1 : vector<1x256xf32> to vector<2x256xf32>
    %3 = arith.addf %0, %2 : vector<2x256xf32>
    %c0_3 = arith.constant 0 : index
    %c0_4 = arith.constant 0 : index
    %4 = vector.load %arg5[%c0_3, %c0_4] : memref<2x256xf32, #tpu.memory_space<vmem>>, vector<2x256xf32>
    tpu.vector_store %arg5[%c0_3, %c0_4], %3 {strides = array<i32>} : memref<2x256xf32, #tpu.memory_space<vmem>>, vector<2x256xf32>,
    return
  }
  func.func @transform_0(%arg0: i32, %arg1: i32, %arg2: memref<1xi32, #tpu.memory_space<smem>>) -> (i32, i32) {
    %c0_i32 = arith.constant 0 : i32
    return %arg1, %arg0 : i32, i32
  }
  func.func @transform_1(%arg0: i32, %arg1: i32, %arg2: memref<1xi32, #tpu.memory_space<smem>>) -> (i32, i32) {
    %c0_i32 = arith.constant 0 : i32
    %c0_i32_0 = arith.constant 0 : i32
    return %c0_i32, %arg0 : i32, i32
  }
  func.func @transform_2(%arg0: i32, %arg1: i32, %arg2: memref<1xi32, #tpu.memory_space<smem>>) -> (i32, i32) {
    %c0_i32 = arith.constant 0 : i32
    return %arg1, %arg0 : i32, i32
  }
}

</mosaic_0001>

<llo_original>
// kernel: tpu_custom_call.1
$region0: #{tpu_custom_call.1}
  #allocation0 [shape = 'u32[]', space=smem, size = 0x4, offset = 0x4, fixed_abs, tag = 'smem constant byte address 0x4 - core index']
  #allocation1 [shape = 'u32[144,128]{1,0:T(1,128)}', space=vmem, size = 0x12000, scoped, tag = 'internal scratch']
  #allocation2 [shape = 's32[1]{0}', space=sflag, size = 0x4, scoped, tag = 'scoped memory for tpu_custom_call.1']
  #allocation3 [shape = 's32[1]{0:T(128)S(6)}', space=smem, size = 0x200, scoped, tag = 'prefetched SMEM operand 0']
  %s0 = inlined_call_operand.<no memory space> [shape: s32[1], index: 0, kind: input, shape index: {}]
  %s1 = inlined_call_operand.hbm [shape: f32[2,256], index: 1, kind: input, shape index: {}]
  %s2 = inlined_call_operand.vmem [shape: f32[1,256], index: 2, kind: input, shape index: {}]
  %s3 = inlined_call_operand.hbm [shape: f32[2,256], index: 3, kind: output, shape index: {}]
  %s4 = sld [smem:[#allocation0]]
  $region22: #{tpu_custom_call.1} parent=0
    _
  %s6 = ssub.s32 1, %s4
  %s7 = scalar_select 0, %s6, %s4
  %8 = sst [smem:[#allocation3]] %s0
  $region1: #{tpu_custom_call.1} parent=0
    #allocation4 [shape = 'u8[2048]{0}', space=vmem, size = 0x800, scoped, tag = 'input window, operand 1, single buffered']
    #allocation5 [shape = 's32[1]{0}', space=sflag, size = 0x4, scoped, tag = 'scoped memory for tpu_custom_call.1']
    #allocation6 [shape = 's32[1]{0}', space=sflag, size = 0x4, scoped, tag = 'scoped memory for tpu_custom_call.1']
    #allocation7 [shape = 'u8[2048]{0}', space=vmem, size = 0x800, scoped, tag = 'output window, operand 0, single buffered']
    %9 = vsyncpa [#allocation5], 0
    %10 = vsyncpa [#allocation6], 0
    // Predicated region
    $region2: #{tpu_custom_call.1} parent=1 // pred_check
      _
    $region3: #{tpu_custom_call.1} parent=1 // pred_check_branch
      %12 = sbr.rel (0) target = $region5
    $region4: #{tpu_custom_call.1} parent=1 // pred_region
      %s14 = ssub.s32 64, 64
      %15 = vsyncadd [#allocation5], %s14
      %s17 = sshll.u32 [#allocation4], 4
      %s18 = int_to_ptr.vmem [resolvable:$true] %s17
      %20 = dma.hbm_to_vmem [thread:$0]  %s1, 64, %s18, [#allocation5]
    $region5: #{tpu_custom_call.1} parent=1 // pred_fallthru
      _
    // Predicated region
    $region6: #{tpu_custom_call.1} parent=1 // pred_check
      _
    $region7: #{tpu_custom_call.1} parent=1 // pred_check_branch
      %22 = sbr.rel (0) target = $region9
    $region8: #{tpu_custom_call.1} parent=1 // pred_region
      _
    $region9: #{tpu_custom_call.1} parent=1 // pred_fallthru
      _
    // Predicated region
    $region10: #{tpu_custom_call.1} parent=1 // pred_check
      _
    $region11: #{tpu_custom_call.1} parent=1 // pred_check_branch
      %24 = sbr.rel (0) target = $region13
    $region12: #{tpu_custom_call.1} parent=1 // pred_region
      %25 = dma.done [#allocation5], 64
    $region13: #{tpu_custom_call.1} parent=1 // pred_fallthru
      _
    %v26 = vld [vmem:[#allocation4] sm:$0xf]
    %v27 = vld [vmem:[%s2] sm:$0x3]
    %v29 = vlaneseq
    %v30 = vshrl.u32 %v29, 7
    %v31 = vsub.s32 0, %v30
    %v32 = vrot.slane %v27, %v31
    %v33 = vlaneseq
    %v34 = vshrl.u32 %v33, 7
    %v35 = vsub.s32 1, %v34
    %v36 = vrot.slane %v27, %v35
    %v37 = vcombine.low %v32, %v36
    %v39 = vunpack.c.l.s4 1983009808
    %v40 = vunpack.c.0.s8 %v39
    %v41 = vlaneseq
    %v42 = vshrl.u32 %v41, 7
    %v43 = vsub.s32 %v40, %v42
    %v44 = vrot.slane %v37, %v43
    %v46 = vadd.f32 %v26, %v44
    %47 = vst [vmem:[#allocation7] sm:$0xf] %v46
    // Predicated region
    $region14: #{tpu_custom_call.1} parent=1 // pred_check
      _
    $region15: #{tpu_custom_call.1} parent=1 // pred_check_branch
      %49 = sbr.rel (0) target = $region17
    $region16: #{tpu_custom_call.1} parent=1 // pred_region
      %s51 = ssub.s32 64, 64
      %52 = vsyncadd [#allocation6], %s51
      %s54 = sshll.u32 [#allocation7], 4
      %s55 = int_to_ptr.vmem [resolvable:$true] %s54
      %57 = dma.vmem_to_hbm [thread:$0]  %s55, 64, %s3, [#allocation6]
    $region17: #{tpu_custom_call.1} parent=1 // pred_fallthru
      _
    // Predicated region
    $region18: #{tpu_custom_call.1} parent=1 // pred_check
      _
    $region19: #{tpu_custom_call.1} parent=1 // pred_check_branch
      %59 = sbr.rel (0) target = $region21
    $region20: #{tpu_custom_call.1} parent=1 // pred_region
      %60 = dma.done [#allocation6], 64
    $region21: #{tpu_custom_call.1} parent=1 // pred_fallthru
      _
    %61 = vsyncpa [#allocation5], 1
    %62 = vsyncpa [#allocation6], 1

</llo_original>
